<compile_context>
chip_gen: v7x
topology: tpu7x:2x2x1
jax: 0.10.0
libtpu: 0.0.40
codegen_flags: <defaults>
</compile_context>

<pallas_src>
import functools

import jax
import jax.numpy as jnp
from jax import lax
from jax.experimental import pallas as pl
from jax.experimental.pallas import tpu as pltpu

_LANE = 128
_SUB = 8
_MAX_BLOCK_ROWS = 2048   # (2048, 128) f32 = 1 MiB/input buffer; sweepable 1024..4096


def _focal_loss_kernel(preds_ref, labels_ref, sum_out_ref, cnt_out_ref,
                       acc_sum, acc_cnt,
                       *, n_valid, block_rows, steps_per_chunk, ignore_index):
    c = pl.program_id(0)      # "parallel" chunk axis (megacore-shardable)
    k = pl.program_id(1)      # "arbitrary" reduction axis within the chunk

    @pl.when(k == 0)
    def _():
        acc_sum[...] = jnp.zeros_like(acc_sum)
        acc_cnt[...] = jnp.zeros_like(acc_cnt)

    # Logical block step (may overhang past the last real block; the index_map clamps
    # the DMA source and the position mask below zeroes any re-read / stale data).
    step = c * steps_per_chunk + k

    x = preds_ref[...].astype(jnp.float32)
    y = labels_ref[...].astype(jnp.float32)

    # Global element index of every entry in this block (row-major over (rows, 128)).
    row = lax.broadcasted_iota(jnp.int32, (block_rows, _LANE), 0)
    lane = lax.broadcasted_iota(jnp.int32, (block_rows, _LANE), 1)
    gidx = (step * block_rows + row) * _LANE + lane
    in_range = gidx < n_valid

    mask = jnp.logical_and(in_range, y != jnp.float32(ignore_index))
    maskf = mask.astype(jnp.float32)

    # Numerically stable BCE-with-logits (same formulation PyTorch uses).
    # log(1 + exp(-|x|)) stays well-conditioned since exp(-|x|) in (0, 1].
    bce = jnp.maximum(x, 0.0) - x * y + jnp.log(1.0 + jnp.exp(-jnp.abs(x)))
    bce = jnp.where(mask, bce, 0.0)

    # Vector accumulation: fold the block onto an (8, 128) accumulator with VPU adds only.
    acc_sum[...] += jnp.sum(bce.reshape(block_rows // _SUB, _SUB, _LANE), axis=0)
    acc_cnt[...] += jnp.sum(maskf.reshape(block_rows // _SUB, _SUB, _LANE), axis=0)

    @pl.when(k == pl.num_programs(1) - 1)
    def _():
        sum_out_ref[...] = acc_sum[...]
        cnt_out_ref[...] = acc_cnt[...]


def focal_loss(preds, labels, *, alpha=0.25, gamma=2.0, ignore_index=255.0):
    """Scalar focal loss; preds/labels are same-shaped arrays (e.g. NCHW)."""
    n = preds.size
    p = preds.reshape(-1)
    l = labels.reshape(-1)

    # Only pad when the flat size is not (8*128)-aligned; padded elements are masked
    # out in-kernel by the global-index test (gidx < n), so pad values are irrelevant.
    tile = _SUB * _LANE
    if n % tile != 0:
        pad = tile - n % tile
        p = jnp.pad(p, (0, pad))
        l = jnp.pad(l, (0, pad))

    rows = p.shape[0] // _LANE           # multiple of 8
    p2 = p.reshape(rows, _LANE)
    l2 = l.reshape(rows, _LANE)

    block_rows = min(_MAX_BLOCK_ROWS, rows)
    steps = (rows + block_rows - 1) // block_rows
    num_chunks = 2 if steps >= 2 else 1               # feeds both TCs on v7x
    steps_per_chunk = (steps + num_chunks - 1) // num_chunks

    def in_map(c, k):
        # Clamp overhanging steps onto the last real block; the in-kernel position mask
        # guarantees they contribute nothing.
        return (jnp.minimum(c * steps_per_chunk + k, steps - 1), 0)

    kernel = functools.partial(
        _focal_loss_kernel,
        n_valid=n, block_rows=block_rows,
        steps_per_chunk=steps_per_chunk, ignore_index=float(ignore_index))

    sum_out, cnt_out = pl.pallas_call(
        kernel,
        out_shape=(jax.ShapeDtypeStruct((num_chunks * _SUB, _LANE), jnp.float32),
                   jax.ShapeDtypeStruct((num_chunks * _SUB, _LANE), jnp.float32)),
        grid_spec=pltpu.PrefetchScalarGridSpec(
            num_scalar_prefetch=0,
            grid=(num_chunks, steps_per_chunk),
            in_specs=[
                pl.BlockSpec((block_rows, _LANE), in_map),
                pl.BlockSpec((block_rows, _LANE), in_map),
            ],
            out_specs=[
                pl.BlockSpec((_SUB, _LANE), lambda c, k: (c, 0)),
                pl.BlockSpec((_SUB, _LANE), lambda c, k: (c, 0)),
            ],
            scratch_shapes=[
                pltpu.VMEM((_SUB, _LANE), jnp.float32),  # vector sum of masked BCE
                pltpu.VMEM((_SUB, _LANE), jnp.float32),  # vector count of valid elems
            ],
        ),
        compiler_params=pltpu.CompilerParams(
            dimension_semantics=("parallel", "arbitrary")),
    )(p2, l2)

    # Tiny final combine (a few hundred f32s) + scalar focal formula in plain JAX.
    total_sum = jnp.sum(sum_out)
    total_cnt = jnp.sum(cnt_out)
    mean_bce = total_sum / total_cnt   # NaN if every element is ignore_index (matches PyTorch)
    logpt = -mean_bce
    pt = jnp.exp(logpt)
    return -((1.0 - pt) ** gamma) * alpha * logpt


def _focal_loss_ref(preds, labels, *, alpha=0.25, gamma=2.0, ignore_index=255.0):
    x = preds.reshape(-1).astype(jnp.float32)
    y = labels.reshape(-1).astype(jnp.float32)
    mask = y != ignore_index
    bce = jnp.maximum(x, 0.0) - x * y + jnp.log1p(jnp.exp(-jnp.abs(x)))
    mean_bce = jnp.sum(jnp.where(mask, bce, 0.0)) / jnp.sum(mask.astype(jnp.float32))
    logpt = -mean_bce
    pt = jnp.exp(logpt)
    return -((1.0 - pt) ** gamma) * alpha * logpt


if __name__ == "__main__":
    key = jax.random.PRNGKey(0)
    k1, k2, k3 = jax.random.split(key, 3)

    N, C, H, W = 2, 4, 16, 16  # NCHW, matching PyTorch convention
    preds = jax.random.normal(k1, (N, C, H, W), dtype=jnp.float32)
    labels = jax.random.bernoulli(k2, 0.5, (N, C, H, W)).astype(jnp.float32)
    # sprinkle ignore_index entries so the masking path is exercised
    ignore_mask = jax.random.uniform(k3, (N, C, H, W)) < 0.1
    labels = jnp.where(ignore_mask, jnp.float32(255.0), labels)

    loss = focal_loss(preds, labels, alpha=0.25, gamma=2.0, ignore_index=255.0)
    loss = jax.block_until_ready(loss)
    ref = _focal_loss_ref(preds, labels, alpha=0.25, gamma=2.0, ignore_index=255.0)
    assert jnp.allclose(loss, ref, atol=1e-5, rtol=1e-5), (loss, ref)

    # ragged (non-128-aligned) shape to exercise the in-kernel tail mask
    preds_r = jax.random.normal(k1, (3, 5, 7), dtype=jnp.float32)
    labels_r = jax.random.bernoulli(k2, 0.5, (3, 5, 7)).astype(jnp.float32)
    loss_r = jax.block_until_ready(focal_loss(preds_r, labels_r))
    ref_r = _focal_loss_ref(preds_r, labels_r)
    assert jnp.allclose(loss_r, ref_r, atol=1e-5, rtol=1e-5), (loss_r, ref_r)

    print("KERNEL_OK")
</pallas_src>

<mosaic_0001>
module attributes {stable_mosaic.version = 11 : i64} {
  func.func @_focal_loss_kernel(%arg0: i32, %arg1: i32, %arg2: memref<16x128xf32, #tpu.memory_space<vmem>>, %arg3: memref<16x128xf32, #tpu.memory_space<vmem>>, %arg4: memref<8x128xf32, #tpu.memory_space<vmem>>, %arg5: memref<8x128xf32, #tpu.memory_space<vmem>>, %arg6: memref<8x128xf32, #tpu.memory_space<vmem>>, %arg7: memref<8x128xf32, #tpu.memory_space<vmem>>) attributes {dimension_semantics = [#tpu.dimension_semantics<parallel>, #tpu.dimension_semantics<arbitrary>], iteration_bounds = array<i64: 1, 1>, scalar_prefetch = 0 : i64, scratch_operands = 2 : i64, tpu.core_type = #tpu.core_type<tc>, window_params = [{transform_indices = @transform_0, window_bounds = array<i64: 16, 128>}, {transform_indices = @transform_1, window_bounds = array<i64: 16, 128>}, {transform_indices = @transform_2, window_bounds = array<i64: 8, 128>}, {transform_indices = @transform_3, window_bounds = array<i64: 8, 128>}]} {
    %c0_i32 = arith.constant 0 : i32
    %0 = arith.cmpi eq, %arg1, %c0_i32 : i32
    %1 = arith.extui %0 : i1 to i32
    %c0_i32_0 = arith.constant 0 : i32
    %2 = arith.cmpi ne, %1, %c0_i32_0 : i32
    scf.if %2 {
      %cst_20 = arith.constant 0.000000e+00 : f32
      %49 = vector.broadcast %cst_20 : f32 to vector<8x128xf32>
      %c0_21 = arith.constant 0 : index
      %c0_22 = arith.constant 0 : index
      %50 = vector.load %arg6[%c0_21, %c0_22] : memref<8x128xf32, #tpu.memory_space<vmem>>, vector<8x128xf32>
      tpu.vector_store %arg6[%c0_21, %c0_22], %49 {strides = array<i32>} : memref<8x128xf32, #tpu.memory_space<vmem>>, vector<8x128xf32>,
      %cst_23 = arith.constant 0.000000e+00 : f32
      %51 = vector.broadcast %cst_23 : f32 to vector<8x128xf32>
      %c0_24 = arith.constant 0 : index
      %c0_25 = arith.constant 0 : index
      %52 = vector.load %arg7[%c0_24, %c0_25] : memref<8x128xf32, #tpu.memory_space<vmem>>, vector<8x128xf32>
      tpu.vector_store %arg7[%c0_24, %c0_25], %51 {strides = array<i32>} : memref<8x128xf32, #tpu.memory_space<vmem>>, vector<8x128xf32>,
    } else {
    }
    %c1_i32 = arith.constant 1 : i32
    %3 = arith.muli %arg0, %c1_i32 : i32
    %4 = arith.addi %3, %arg1 : i32
    %c0 = arith.constant 0 : index
    %c0_1 = arith.constant 0 : index
    %5 = vector.load %arg2[%c0, %c0_1] : memref<16x128xf32, #tpu.memory_space<vmem>>, vector<16x128xf32>
    %c0_2 = arith.constant 0 : index
    %c0_3 = arith.constant 0 : index
    %6 = vector.load %arg3[%c0_2, %c0_3] : memref<16x128xf32, #tpu.memory_space<vmem>>, vector<16x128xf32>
    %7 = tpu.iota {dimensions = array<i32: 0>} : vector<16x128xi32>
    %8 = tpu.iota {dimensions = array<i32: 1>} : vector<16x128xi32>
    %c16_i32 = arith.constant 16 : i32
    %9 = arith.muli %4, %c16_i32 : i32
    %10 = vector.broadcast %9 : i32 to vector<16x128xi32>
    %11 = arith.addi %10, %7 : vector<16x128xi32>
    %c128_i32 = arith.constant 128 : i32
    %12 = vector.broadcast %c128_i32 : i32 to vector<16x128xi32>
    %13 = arith.muli %11, %12 : vector<16x128xi32>
    %14 = arith.addi %13, %8 : vector<16x128xi32>
    %c2048_i32 = arith.constant 2048 : i32
    %15 = vector.broadcast %c2048_i32 : i32 to vector<16x128xi32>
    %16 = arith.cmpi slt, %14, %15 : vector<16x128xi32>
    %cst = arith.constant 2.550000e+02 : f32
    %17 = vector.broadcast %cst : f32 to vector<16x128xf32>
    %18 = arith.cmpf one, %6, %17 : vector<16x128xf32>
    %19 = arith.andi %16, %18 : vector<16x128xi1>
    %20 = arith.extui %19 : vector<16x128xi1> to vector<16x128xi32>
    %21 = arith.sitofp %20 : vector<16x128xi32> to vector<16x128xf32>
    %cst_4 = arith.constant 0.000000e+00 : f32
    %22 = vector.broadcast %cst_4 : f32 to vector<16x128xf32>
    %23 = arith.maximumf %5, %22 : vector<16x128xf32>
    %24 = arith.mulf %5, %6 : vector<16x128xf32>
    %25 = arith.subf %23, %24 : vector<16x128xf32>
    %26 = math.absf %5 : vector<16x128xf32>
    %cst_5 = arith.constant 0.000000e+00 : f32
    %27 = vector.broadcast %cst_5 : f32 to vector<16x128xf32>
    %28 = arith.subf %27, %26 : vector<16x128xf32>
    %29 = math.exp %28 : vector<16x128xf32>
    %cst_6 = arith.constant 1.000000e+00 : f32
    %30 = vector.broadcast %cst_6 : f32 to vector<16x128xf32>
    %31 = arith.addf %30, %29 : vector<16x128xf32>
    %32 = math.log %31 : vector<16x128xf32>
    %33 = arith.addf %25, %32 : vector<16x128xf32>
    %cst_7 = arith.constant 0.000000e+00 : f32
    %34 = vector.broadcast %cst_7 : f32 to vector<16x128xf32>
    %35 = arith.select %19, %33, %34 : vector<16x128xi1>, vector<16x128xf32>
    %c0_8 = arith.constant 0 : index
    %c0_9 = arith.constant 0 : index
    %36 = vector.load %arg6[%c0_8, %c0_9] : memref<8x128xf32, #tpu.memory_space<vmem>>, vector<8x128xf32>
    %37 = vector.shape_cast %35 : vector<16x128xf32> to vector<2x8x128xf32>
    %cst_10 = arith.constant dense<0.000000e+00> : vector<8x128xf32>
    %38 = vector.multi_reduction <add>, %37, %cst_10 [0] : vector<2x8x128xf32> to vector<8x128xf32>
    %39 = arith.addf %36, %38 : vector<8x128xf32>
    %c0_11 = arith.constant 0 : index
    %c0_12 = arith.constant 0 : index
    %40 = vector.load %arg6[%c0_11, %c0_12] : memref<8x128xf32, #tpu.memory_space<vmem>>, vector<8x128xf32>
    tpu.vector_store %arg6[%c0_11, %c0_12], %39 {strides = array<i32>} : memref<8x128xf32, #tpu.memory_space<vmem>>, vector<8x128xf32>,
    %c0_13 = arith.constant 0 : index
    %c0_14 = arith.constant 0 : index
    %41 = vector.load %arg7[%c0_13, %c0_14] : memref<8x128xf32, #tpu.memory_space<vmem>>, vector<8x128xf32>
    %42 = vector.shape_cast %21 : vector<16x128xf32> to vector<2x8x128xf32>
    %cst_15 = arith.constant dense<0.000000e+00> : vector<8x128xf32>
    %43 = vector.multi_reduction <add>, %42, %cst_15 [0] : vector<2x8x128xf32> to vector<8x128xf32>
    %44 = arith.addf %41, %43 : vector<8x128xf32>
    %c0_16 = arith.constant 0 : index
    %c0_17 = arith.constant 0 : index
    %45 = vector.load %arg7[%c0_16, %c0_17] : memref<8x128xf32, #tpu.memory_space<vmem>>, vector<8x128xf32>
    tpu.vector_store %arg7[%c0_16, %c0_17], %44 {strides = array<i32>} : memref<8x128xf32, #tpu.memory_space<vmem>>, vector<8x128xf32>,
    %c0_i32_18 = arith.constant 0 : i32
    %46 = arith.cmpi eq, %arg1, %c0_i32_18 : i32
    %47 = arith.extui %46 : i1 to i32
    %c0_i32_19 = arith.constant 0 : i32
    %48 = arith.cmpi ne, %47, %c0_i32_19 : i32
    scf.if %48 {
      %c0_20 = arith.constant 0 : index
      %c0_21 = arith.constant 0 : index
      %49 = vector.load %arg6[%c0_20, %c0_21] : memref<8x128xf32, #tpu.memory_space<vmem>>, vector<8x128xf32>
      %c0_22 = arith.constant 0 : index
      %c0_23 = arith.constant 0 : index
      %50 = vector.load %arg4[%c0_22, %c0_23] : memref<8x128xf32, #tpu.memory_space<vmem>>, vector<8x128xf32>
      tpu.vector_store %arg4[%c0_22, %c0_23], %49 {strides = array<i32>} : memref<8x128xf32, #tpu.memory_space<vmem>>, vector<8x128xf32>,
      %c0_24 = arith.constant 0 : index
      %c0_25 = arith.constant 0 : index
      %51 = vector.load %arg7[%c0_24, %c0_25] : memref<8x128xf32, #tpu.memory_space<vmem>>, vector<8x128xf32>
      %c0_26 = arith.constant 0 : index
      %c0_27 = arith.constant 0 : index
      %52 = vector.load %arg5[%c0_26, %c0_27] : memref<8x128xf32, #tpu.memory_space<vmem>>, vector<8x128xf32>
      tpu.vector_store %arg5[%c0_26, %c0_27], %51 {strides = array<i32>} : memref<8x128xf32, #tpu.memory_space<vmem>>, vector<8x128xf32>,
    } else {
    }
    return
  }
  func.func @transform_0(%arg0: i32, %arg1: i32) -> (i32, i32) {
    %c1_i32 = arith.constant 1 : i32
    %0 = arith.muli %arg0, %c1_i32 : i32
    %1 = arith.addi %0, %arg1 : i32
    %c0_i32 = arith.constant 0 : i32
    %2 = arith.minsi %1, %c0_i32 : i32
    %c0_i32_0 = arith.constant 0 : i32
    %c0_i32_1 = arith.constant 0 : i32
    return %2, %c0_i32_0 : i32, i32
  }
  func.func @transform_1(%arg0: i32, %arg1: i32) -> (i32, i32) {
    %c1_i32 = arith.constant 1 : i32
    %0 = arith.muli %arg0, %c1_i32 : i32
    %1 = arith.addi %0, %arg1 : i32
    %c0_i32 = arith.constant 0 : i32
    %2 = arith.minsi %1, %c0_i32 : i32
    %c0_i32_0 = arith.constant 0 : i32
    %c0_i32_1 = arith.constant 0 : i32
    return %2, %c0_i32_0 : i32, i32
  }
  func.func @transform_2(%arg0: i32, %arg1: i32) -> (i32, i32) {
    %c0_i32 = arith.constant 0 : i32
    %c0_i32_0 = arith.constant 0 : i32
    return %arg0, %c0_i32 : i32, i32
  }
  func.func @transform_3(%arg0: i32, %arg1: i32) -> (i32, i32) {
    %c0_i32 = arith.constant 0 : i32
    %c0_i32_0 = arith.constant 0 : i32
    return %arg0, %c0_i32 : i32, i32
  }
}

</mosaic_0001>

<llo_original>
// kernel: tpu_custom_call.1
$region0: #{tpu_custom_call.1}
  #allocation0 [shape = 'u32[]', space=smem, size = 0x4, offset = 0x4, fixed_abs, tag = 'smem constant byte address 0x4 - core index']
  #allocation1 [shape = 'u32[144,128]{1,0:T(1,128)}', space=vmem, size = 0x12000, scoped, tag = 'internal scratch']
  #allocation2 [shape = 'f32[8,128]{1,0:T(8,128)}', space=vmem, size = 0x1000, scoped, tag = 'scratch operand']
  #allocation3 [shape = 'f32[8,128]{1,0:T(8,128)}', space=vmem, size = 0x1000, scoped, tag = 'scratch operand']
  %s0 = inlined_call_operand.hbm [shape: f32[16,128], index: 0, kind: input, shape index: {}]
  %s1 = inlined_call_operand.hbm [shape: f32[16,128], index: 1, kind: input, shape index: {}]
  %s2 = inlined_call_operand.hbm [shape: f32[8,128], index: 2, kind: output, shape index: {0}]
  %s3 = inlined_call_operand.hbm [shape: f32[8,128], index: 3, kind: output, shape index: {1}]
  %4 = xla_tuple %s2, %s3
  %s5 = sld [smem:[#allocation0]]
  $region42: #{tpu_custom_call.1} parent=0
    _
  %s7 = ssub.s32 1, %s5
  %s8 = scalar_select 0, %s7, %s5
  $region1: #{tpu_custom_call.1} parent=0
    #allocation4 [shape = 'u8[8192]{0}', space=vmem, size = 0x2000, scoped, tag = 'input window, operand 0, single buffered']
    #allocation5 [shape = 's32[1]{0}', space=sflag, size = 0x4, scoped, tag = 'scoped memory for tpu_custom_call.1']
    #allocation6 [shape = 's32[1]{0}', space=sflag, size = 0x4, scoped, tag = 'scoped memory for tpu_custom_call.1']
    #allocation7 [shape = 'u8[8192]{0}', space=vmem, size = 0x2000, scoped, tag = 'input window, operand 1, single buffered']
    #allocation8 [shape = 's32[1]{0}', space=sflag, size = 0x4, scoped, tag = 'scoped memory for tpu_custom_call.1']
    #allocation9 [shape = 'u8[4096]{0}', space=vmem, size = 0x1000, scoped, tag = 'output window, operand 0, single buffered']
    #allocation10 [shape = 'u8[4096]{0}', space=vmem, size = 0x1000, scoped, tag = 'output window, operand 1, single buffered']
    #allocation11 [shape = 's32[1]{0}', space=sflag, size = 0x4, scoped, tag = 'scoped memory for tpu_custom_call.1']
    %9 = vsyncpa [#allocation5], 0
    %10 = vsyncpa [#allocation8], 0
    %11 = vsyncpa [#allocation6], 0
    %12 = vsyncpa [#allocation11], 0
    // Predicated region
    $region2: #{tpu_custom_call.1} parent=1 // pred_check
      _
    $region3: #{tpu_custom_call.1} parent=1 // pred_check_branch
      %14 = sbr.rel (0) target = $region5
    $region4: #{tpu_custom_call.1} parent=1 // pred_region
      %s15 = sadd.s32 0, 0
      %p16 = scmp.lt.s32.totalorder %s15, 0
      %s17 = scalar_select %p16, %s15, 0
      %s18 = smul.u32 2, %s17
      %s20 = ssub.s32 256, 256
      %21 = vsyncadd [#allocation5], %s20
      %s22 = smul.addr %s18, 128
      %s23 = scalar_lea.hbm %s0, %s22
      %s24 = sshll.u32 [#allocation4], 4
      %s25 = int_to_ptr.vmem [resolvable:$true] %s24
      %30 = dma.hbm_to_vmem [thread:$0]  %s23, 256, %s25, [#allocation5], 128, 128, 8
    $region5: #{tpu_custom_call.1} parent=1 // pred_fallthru
      _
    // Predicated region
    $region6: #{tpu_custom_call.1} parent=1 // pred_check
      _
    $region7: #{tpu_custom_call.1} parent=1 // pred_check_branch
      %32 = sbr.rel (0) target = $region9
    $region8: #{tpu_custom_call.1} parent=1 // pred_region
      %s33 = sadd.s32 0, 0
      %p34 = scmp.lt.s32.totalorder %s33, 0
      %s35 = scalar_select %p34, %s33, 0
      %s36 = smul.u32 2, %s35
      %s38 = ssub.s32 256, 256
      %39 = vsyncadd [#allocation8], %s38
      %s40 = smul.addr %s36, 128
      %s41 = scalar_lea.hbm %s1, %s40
      %s42 = sshll.u32 [#allocation7], 4
      %s43 = int_to_ptr.vmem [resolvable:$true] %s42
      %48 = dma.hbm_to_vmem [thread:$0]  %s41, 256, %s43, [#allocation8], 128, 128, 8
    $region9: #{tpu_custom_call.1} parent=1 // pred_fallthru
      _
    // Predicated region
    $region10: #{tpu_custom_call.1} parent=1 // pred_check
      _
    $region11: #{tpu_custom_call.1} parent=1 // pred_check_branch
      %50 = sbr.rel (0) target = $region13
    $region12: #{tpu_custom_call.1} parent=1 // pred_region
      %51 = dma.done [#allocation5], 256
    $region13: #{tpu_custom_call.1} parent=1 // pred_fallthru
      _
    // Predicated region
    $region14: #{tpu_custom_call.1} parent=1 // pred_check
      _
    $region15: #{tpu_custom_call.1} parent=1 // pred_check_branch
      %53 = sbr.rel (0) target = $region17
    $region16: #{tpu_custom_call.1} parent=1 // pred_region
      %54 = dma.done [#allocation8], 256
    $region17: #{tpu_custom_call.1} parent=1 // pred_fallthru
      _
    %s55 = sadd.s32 0, 0
    %p56 = scmp.lt.s32.totalorder %s55, 0
    %s57 = scalar_select %p56, %s55, 0
    %s58 = smul.u32 2, %s57
    %s59 = sadd.s32 0, 0
    %p60 = scmp.lt.s32.totalorder %s59, 0
    %s61 = scalar_select %p60, %s59, 0
    %s62 = smul.u32 2, %s61
    %p63 = scmp.eq.s32.totalorder 0, 0
    // Predicated region
    $region18: #{tpu_custom_call.1} parent=1 // pred_check
      %p64 = pneg %p63
    $region19: #{tpu_custom_call.1} parent=1 // pred_check_branch
      %66 = sbr.rel (%p64) target = $region21
    $region20: #{tpu_custom_call.1} parent=1 // pred_region
      %67 = vst [vmem:[#allocation2] sm:$0xff] 0.0
      %68 = vst [vmem:[#allocation3] sm:$0xff] 0.0
    $region21: #{tpu_custom_call.1} parent=1 // pred_fallthru
      _
    %s69 = sadd.s32 0, 0
    %v70 = vld [vmem:[#allocation4] sm:$0xff]
    %v71 = vld [vmem:[#allocation4 + $0x8] sm:$0xff]
    %v72 = vld [vmem:[#allocation7] sm:$0xff]
    %v73 = vld [vmem:[#allocation7 + $0x8] sm:$0xff]
    %v74 = vlaneseq
    %v75 = vshrl.u32 %v74, 7
    %v76 = vadd.s32 %v75, 8
    %v77 = vlaneseq
    %v78 = vand.u32 %v77, 127
    %s79 = smul.u32 %s69, 16
    %v80 = vstv %s79
    %v81 = vadd.s32 %v80, %v75
    %v82 = vadd.s32 %v80, %v76
    %v83 = vmul.u32 %v81, 128
    %v84 = vmul.u32 %v82, 128
    %v85 = vadd.s32 %v83, %v78
    %v86 = vadd.s32 %v84, %v78
    %vm87 = vcmp.lt.s32.totalorder %v85, 2048
    %vm88 = vcmp.lt.s32.totalorder %v86, 2048
    %vm89 = vcmp.ne.f32.partialorder %v72, 255.0
    %vm90 = vcmp.ne.f32.partialorder %v73, 255.0
    %vm91 = vmand %vm87, %vm89
    %vm92 = vmand %vm88, %vm90
    %v93 = vsel %vm91, 1, 0
    %v94 = vsel %vm92, 1, 0
    %v95 = vcvt.s32.f32 %v93
    %v96 = vcvt.s32.f32 %v94
    %v97 = vmax.f32 %v70, 0.0
    %v98 = vmax.f32 %v71, 0.0
    %v99 = vmul.f32 %v70, %v72
    %v100 = vmul.f32 %v71, %v73
    %v101 = vsub.f32 %v97, %v99
    %v102 = vsub.f32 %v98, %v100
    %v103 = vand.u32 2147483647, %v70
    %v104 = vand.u32 2147483647, %v71
    %v105 = vsub.f32 0.0, %v103
    %v106 = vsub.f32 0.0, %v104
    %v107 = vmul.f32 %v105, 1.442695
    %v108 = vpow.pop %v107
    %v109 = vmul.f32 %v106, 1.442695
    %v110 = vpow.pop %v109
    %v111 = vadd.f32 %v108, 1.0
    %v112 = vadd.f32 %v110, 1.0
    %v113 = vlog2.pop %v111
    %v114 = vmul.f32 %v113, 0.6931472
    %v115 = vlog2.pop %v112
    %v116 = vmul.f32 %v115, 0.6931472
    %v117 = vadd.f32 %v101, %v114
    %v118 = vadd.f32 %v102, %v116
    %v119 = vsel %vm91, %v117, 0.0
    %v120 = vsel %vm92, %v118, 0.0
    %v121 = vld [vmem:[#allocation2] sm:$0xff]
    %v122 = vadd.f32 %v119, %v120
    %v123 = vadd.f32 %v121, %v122
    %124 = vst [vmem:[#allocation2] sm:$0xff] %v123
    %v125 = vld [vmem:[#allocation3] sm:$0xff]
    %v126 = vadd.f32 %v95, %v96
    %v127 = vadd.f32 %v125, %v126
    %128 = vst [vmem:[#allocation3] sm:$0xff] %v127
    // Predicated region
    $region22: #{tpu_custom_call.1} parent=1 // pred_check
      %p129 = pneg %p63
    $region23: #{tpu_custom_call.1} parent=1 // pred_check_branch
      %131 = sbr.rel (%p129) target = $region25
    $region24: #{tpu_custom_call.1} parent=1 // pred_region
      %v132 = vld [vmem:[#allocation2] sm:$0xff]
      %133 = vst [vmem:[#allocation9] sm:$0xff] %v132
      %v134 = vld [vmem:[#allocation3] sm:$0xff]
      %135 = vst [vmem:[#allocation10] sm:$0xff] %v134
    $region25: #{tpu_custom_call.1} parent=1 // pred_fallthru
      _
    // Predicated region
    $region26: #{tpu_custom_call.1} parent=1 // pred_check
      _
    $region27: #{tpu_custom_call.1} parent=1 // pred_check_branch
      %137 = sbr.rel (0) target = $region29
    $region28: #{tpu_custom_call.1} parent=1 // pred_region
      %s139 = ssub.s32 128, 128
      %140 = vsyncadd [#allocation6], %s139
      %s142 = sshll.u32 [#allocation9], 4
      %s143 = int_to_ptr.vmem [resolvable:$true] %s142
      %145 = dma.vmem_to_hbm [thread:$0]  %s143, 128, %s2, [#allocation6]
    $region29: #{tpu_custom_call.1} parent=1 // pred_fallthru
      _
    // Predicated region
    $region30: #{tpu_custom_call.1} parent=1 // pred_check
      _
    $region31: #{tpu_custom_call.1} parent=1 // pred_check_branch
      %147 = sbr.rel (0) target = $region33
    $region32: #{tpu_custom_call.1} parent=1 // pred_region
      %s149 = ssub.s32 128, 128
      %150 = vsyncadd [#allocation11], %s149
      %s152 = sshll.u32 [#allocation10], 4
      %s153 = int_to_ptr.vmem [resolvable:$true] %s152
      %155 = dma.vmem_to_hbm [thread:$0]  %s153, 128, %s3, [#allocation11]
    $region33: #{tpu_custom_call.1} parent=1 // pred_fallthru
      _
    // Predicated region
    $region34: #{tpu_custom_call.1} parent=1 // pred_check
      _
    $region35: #{tpu_custom_call.1} parent=1 // pred_check_branch
      %157 = sbr.rel (0) target = $region37
    $region36: #{tpu_custom_call.1} parent=1 // pred_region
      %158 = dma.done [#allocation6], 128
    $region37: #{tpu_custom_call.1} parent=1 // pred_fallthru
      _
    // Predicated region
    $region38: #{tpu_custom_call.1} parent=1 // pred_check
      _
    $region39: #{tpu_custom_call.1} parent=1 // pred_check_branch
      %160 = sbr.rel (0) target = $region41
    $region40: #{tpu_custom_call.1} parent=1 // pred_region
      %161 = dma.done [#allocation11], 128
    $region41: #{tpu_custom_call.1} parent=1 // pred_fallthru
      _
    %162 = vsyncpa [#allocation5], 1
    %163 = vsyncpa [#allocation8], 1
    %164 = vsyncpa [#allocation6], 1
    %165 = vsyncpa [#allocation11], 1

</llo_original>
